<compile_context>
chip_gen: v5e
topology: v5e:2x2
jax: 0.10.0
libtpu: 0.0.40
codegen_flags: <defaults>
</compile_context>

<pallas_src>
import math

import jax
import jax.numpy as jnp
from jax.experimental import pallas as pl
from jax.experimental.pallas import tpu as pltpu


def _round_up(x, m):
    return ((x + m - 1) // m) * m


def _kernel_single_k(x_ref, w_ref, b_ref, o_ref):
    # x_ref: (tile_n, K)   w_ref: (K, c_pad)   b_ref: (1, c_pad) f32
    # o_ref: (tile_n, c_pad)
    o_ref[...] = (
        jnp.dot(x_ref[...], w_ref[...], preferred_element_type=jnp.float32)
        + b_ref[...]
    ).astype(o_ref.dtype)


def _make_multi_k_kernel(tile_k, resident_w):
    def kernel(x_ref, w_ref, b_ref, o_ref, acc_ref):
        # x_ref: (tile_n, tile_k)
        # w_ref: (k_pad, c_pad) if resident_w else (tile_k, c_pad)
        # b_ref: (1, c_pad) f32    o_ref: (tile_n, c_pad)
        # acc_ref: (tile_n, c_pad) f32, resident across the K ("arbitrary") axis.
        k = pl.program_id(1)

        @pl.when(k == 0)
        def _():
            acc_ref[...] = jnp.zeros_like(acc_ref)

        if resident_w:
            w = w_ref[pl.ds(pl.multiple_of(k * tile_k, 128), tile_k), :]
        else:
            w = w_ref[...]
        acc_ref[...] += jnp.dot(x_ref[...], w, preferred_element_type=jnp.float32)

        @pl.when(k == pl.num_programs(1) - 1)
        def _():
            o_ref[...] = (acc_ref[...] + b_ref[...]).astype(o_ref.dtype)

    return kernel


def logreg_forward(seq, weight, bias, *, tile_n=None, tile_k=None):
    """seq: (N, ft_in); weight: (nb_classes, ft_in) [PyTorch layout];
    bias: (nb_classes,). Returns (N, nb_classes) in seq's dtype."""
    N, ft_in = seq.shape
    nb_classes, ft_in_w = weight.shape
    assert ft_in_w == ft_in, "weight must be (nb_classes, ft_in)"
    out_dtype = seq.dtype

    x_item = jnp.dtype(seq.dtype).itemsize
    w_item = jnp.dtype(weight.dtype).itemsize
    o_item = jnp.dtype(out_dtype).itemsize

    # Sublane packing: f32 -> 8 rows/vreg, bf16 -> 16, int8/fp8 -> 32.
    base_n = {4: 8, 2: 16, 1: 32}.get(x_item, 8)

    # Lane-dense output: pad the class dim up to a multiple of 128.
    c_pad = _round_up(max(nb_classes, 128), 128)

    # ---- K tiling ----------------------------------------------------------
    multi_k = ft_in > 2048
    if multi_k:
        tile_k = 1024 if tile_k is None else max(128, _round_up(int(tile_k), 128))
    else:
        tile_k = ft_in

    # Keep the (transposed, padded) weight fully VMEM-resident when small:
    # DMA'd exactly once instead of once per row tile.
    resident_w = multi_k and (2 * _round_up(ft_in, 128) * c_pad * w_item) <= (24 << 20)

    # ---- Row tiling --------------------------------------------------------
    user_tile_n = tile_n is not None
    if tile_n is None:
        tile_n = 1024
    tile_n = max(base_n, _round_up(int(tile_n), base_n))
    tile_n = min(tile_n, _round_up(N, base_n))
    # v7x has 2 TensorCores: ensure the "parallel" row axis has >= 2 steps
    # whenever there are enough rows to split.
    if (not user_tile_n) and _round_up(N, tile_n) // tile_n < 2 and N > base_n:
        tile_n = max(base_n, _round_up((N + 1) // 2, base_n))

    # ---- VMEM budget (v7x: 64 MiB physical; v5e/v6e: 128 MiB) --------------
    try:
        vmem_cap = int(pltpu.get_tpu_info().vmem_capacity_bytes)
    except Exception:
        vmem_cap = 64 << 20  # assume worst case (v7x)
    budget = max(24 << 20, vmem_cap - (16 << 20))

    def footprint(tn, tk):
        kp = _round_up(ft_in, tk)
        w_buf = (2 * kp * c_pad * w_item) if resident_w else (2 * tk * c_pad * w_item)
        acc = tn * c_pad * 4 if multi_k else 0
        return (2 * tn * tk * x_item + w_buf + 2 * tn * c_pad * o_item
                + acc + 2 * c_pad * 4)

    while footprint(tile_n, tile_k) > budget:
        can_shrink_k = multi_k and tile_k > 128
        if tile_n > 256 or (not can_shrink_k and tile_n > base_n):
            tile_n = max(base_n, _round_up(tile_n // 2, base_n))
        elif can_shrink_k:
            tile_k = max(128, _round_up(tile_k // 2, 128))
        else:
            break

    n_pad = _round_up(N, tile_n)
    k_pad = _round_up(ft_in, tile_k) if multi_k else ft_in

    # ---- Pad operands (padded rows / K-cols / classes are zeros) -----------
    x_p = seq
    if n_pad != N or k_pad != ft_in:
        x_p = jnp.pad(seq, ((0, n_pad - N), (0, k_pad - ft_in)))
    # One-time transpose to (ft_in, nb_classes) -> standard MxK @ KxN MXU feed.
    w_t = weight.T
    if k_pad != ft_in or c_pad != nb_classes:
        w_t = jnp.pad(w_t, ((0, k_pad - ft_in), (0, c_pad - nb_classes)))
    b_p = bias.astype(jnp.float32)
    if c_pad != nb_classes:
        b_p = jnp.pad(b_p, ((0, c_pad - nb_classes),))
    b2d = b_p.reshape(1, c_pad)

    cost = pl.CostEstimate(
        flops=2 * N * ft_in * nb_classes,
        transcendentals=0,
        bytes_accessed=(N * ft_in * x_item + ft_in * nb_classes * w_item
                        + N * nb_classes * o_item + nb_classes * 4),
    )

    vmem_limit = int(min(max(vmem_cap - (8 << 20), 24 << 20),
                         max(footprint(tile_n, tile_k) + (4 << 20), 32 << 20)))

    if not multi_k:
        out_padded = pl.pallas_call(
            _kernel_single_k,
            out_shape=jax.ShapeDtypeStruct((n_pad, c_pad), out_dtype),
            grid_spec=pltpu.PrefetchScalarGridSpec(
                num_scalar_prefetch=0,
                grid=(n_pad // tile_n,),
                in_specs=[
                    pl.BlockSpec((tile_n, k_pad), lambda i: (i, 0)),
                    pl.BlockSpec((k_pad, c_pad), lambda i: (0, 0)),
                    pl.BlockSpec((1, c_pad), lambda i: (0, 0)),
                ],
                out_specs=pl.BlockSpec((tile_n, c_pad), lambda i: (i, 0)),
            ),
            compiler_params=pltpu.CompilerParams(
                dimension_semantics=("parallel",),
                vmem_limit_bytes=vmem_limit,
            ),
            cost_estimate=cost,
        )(x_p, w_t, b2d)
    else:
        if resident_w:
            w_spec = pl.BlockSpec((k_pad, c_pad), lambda i, k: (0, 0))
        else:
            w_spec = pl.BlockSpec((tile_k, c_pad), lambda i, k: (k, 0))
        out_padded = pl.pallas_call(
            _make_multi_k_kernel(tile_k, resident_w),
            out_shape=jax.ShapeDtypeStruct((n_pad, c_pad), out_dtype),
            grid_spec=pltpu.PrefetchScalarGridSpec(
                num_scalar_prefetch=0,
                grid=(n_pad // tile_n, k_pad // tile_k),
                in_specs=[
                    pl.BlockSpec((tile_n, tile_k), lambda i, k: (i, k)),
                    w_spec,
                    pl.BlockSpec((1, c_pad), lambda i, k: (0, 0)),
                ],
                out_specs=pl.BlockSpec((tile_n, c_pad), lambda i, k: (i, 0)),
                scratch_shapes=[pltpu.VMEM((tile_n, c_pad), jnp.float32)],
            ),
            compiler_params=pltpu.CompilerParams(
                dimension_semantics=("parallel", "arbitrary"),
                vmem_limit_bytes=vmem_limit,
            ),
            cost_estimate=cost,
        )(x_p, w_t, b2d)

    return out_padded[:N, :nb_classes]


def xavier_uniform(key, shape, dtype=jnp.float32):
    # matches torch.nn.init.xavier_uniform_ for a (fan_out, fan_in) Linear weight
    fan_out, fan_in = shape
    limit = math.sqrt(6.0 / (fan_in + fan_out))
    return jax.random.uniform(key, shape, dtype=dtype, minval=-limit, maxval=limit)


if __name__ == "__main__":
    key = jax.random.PRNGKey(0)
    k_x, k_w = jax.random.split(key)

    # --- small shapes mirroring LogReg(ft_in=32, nb_classes=16) ------------
    N, ft_in, nb_classes = 8, 32, 16
    seq = jax.random.normal(k_x, (N, ft_in), dtype=jnp.float32)
    # Deterministic parameter init mirroring LogReg.__init__:
    #   weight: xavier_uniform, bias: zeros
    weight = xavier_uniform(k_w, (nb_classes, ft_in))
    bias = jnp.zeros((nb_classes,), dtype=jnp.float32)

    ref = seq @ weight.T + bias
    out = logreg_forward(seq, weight, bias)
    jax.block_until_ready(out)
    assert out.shape == (N, nb_classes)
    assert jnp.allclose(out, ref, atol=1e-5, rtol=1e-5)

    # --- exercise the K-tiled, resident-weight, split-row-grid path --------
    N2, ft2, c2 = 64, 4096, 10
    seq2 = jax.random.normal(k_x, (N2, ft2), dtype=jnp.float32)
    w2 = xavier_uniform(k_w, (c2, ft2))
    b2 = jnp.zeros((c2,), dtype=jnp.float32)
    ref2 = seq2 @ w2.T + b2
    out2 = logreg_forward(seq2, w2, b2)
    jax.block_until_ready(out2)
    assert out2.shape == (N2, c2)
    assert jnp.allclose(out2, ref2, atol=1e-3, rtol=1e-3)

    print("KERNEL_OK")
</pallas_src>

<mosaic_0001>
module attributes {stable_mosaic.version = 11 : i64} {
  func.func @_kernel_single_k(%arg0: i32, %arg1: memref<8x32xf32, #tpu.memory_space<vmem>>, %arg2: memref<32x128xf32, #tpu.memory_space<vmem>>, %arg3: memref<1x128xf32, #tpu.memory_space<vmem>>, %arg4: memref<8x128xf32, #tpu.memory_space<vmem>>) attributes {dimension_semantics = [#tpu.dimension_semantics<parallel>], iteration_bounds = array<i64: 1>, scalar_prefetch = 0 : i64, scratch_operands = 0 : i64, tpu.core_type = #tpu.core_type<tc>, window_params = [{transform_indices = @transform_0, window_bounds = array<i64: 8, 32>}, {pipeline_mode = #tpu.pipeline_mode<synchronous>, transform_indices = @transform_1, window_bounds = array<i64: 32, 128>}, {pipeline_mode = #tpu.pipeline_mode<synchronous>, transform_indices = @transform_2, window_bounds = array<i64: 1, 128>}, {transform_indices = @transform_3, window_bounds = array<i64: 8, 128>}]} {
    %c0 = arith.constant 0 : index
    %c0_0 = arith.constant 0 : index
    %0 = vector.load %arg1[%c0, %c0_0] : memref<8x32xf32, #tpu.memory_space<vmem>>, vector<8x32xf32>
    %c0_1 = arith.constant 0 : index
    %c0_2 = arith.constant 0 : index
    %1 = vector.load %arg2[%c0_1, %c0_2] : memref<32x128xf32, #tpu.memory_space<vmem>>, vector<32x128xf32>
    %cst = arith.constant dense<0.000000e+00> : vector<8x128xf32>
    %2 = tpu.matmul %0, %1, %cst {dimension_numbers = #tpu.dot_dimension_numbers<[1], [0], [0], [1], [0, 0, 1, 1], [], []>} : vector<8x32xf32>, vector<32x128xf32>, vector<8x128xf32> -> vector<8x128xf32>
    %c0_3 = arith.constant 0 : index
    %c0_4 = arith.constant 0 : index
    %3 = vector.load %arg3[%c0_3, %c0_4] : memref<1x128xf32, #tpu.memory_space<vmem>>, vector<1x128xf32>
    %4 = vector.broadcast %3 : vector<1x128xf32> to vector<8x128xf32>
    %5 = arith.addf %2, %4 : vector<8x128xf32>
    %c0_5 = arith.constant 0 : index
    %c0_6 = arith.constant 0 : index
    %6 = vector.load %arg4[%c0_5, %c0_6] : memref<8x128xf32, #tpu.memory_space<vmem>>, vector<8x128xf32>
    tpu.vector_store %arg4[%c0_5, %c0_6], %5 {strides = array<i32>} : memref<8x128xf32, #tpu.memory_space<vmem>>, vector<8x128xf32>,
    return
  }
  func.func @transform_0(%arg0: i32) -> (i32, i32) {
    %c0_i32 = arith.constant 0 : i32
    %c0_i32_0 = arith.constant 0 : i32
    return %arg0, %c0_i32 : i32, i32
  }
  func.func @transform_1(%arg0: i32) -> (i32, i32) {
    %c0_i32 = arith.constant 0 : i32
    %c0_i32_0 = arith.constant 0 : i32
    %c0_i32_1 = arith.constant 0 : i32
    return %c0_i32, %c0_i32_0 : i32, i32
  }
  func.func @transform_2(%arg0: i32) -> (i32, i32) {
    %c0_i32 = arith.constant 0 : i32
    %c0_i32_0 = arith.constant 0 : i32
    %c0_i32_1 = arith.constant 0 : i32
    return %c0_i32, %c0_i32_0 : i32, i32
  }
  func.func @transform_3(%arg0: i32) -> (i32, i32) {
    %c0_i32 = arith.constant 0 : i32
    %c0_i32_0 = arith.constant 0 : i32
    return %arg0, %c0_i32 : i32, i32
  }
}

</mosaic_0001>

<llo_original>
// kernel: tpu_custom_call.1
$region0: #{tpu_custom_call.1}
  #allocation0 [shape = 'u32[]', space=smem, size = 0x4, offset = 0x4, fixed_abs, tag = 'smem constant byte address 0x4 - core index']
  #allocation1 [shape = 'u32[72,128]{1,0:T(1,128)}', space=vmem, size = 0x9000, scoped, tag = 'internal scratch']
  %s0 = inlined_call_operand.hbm [shape: f32[8,32], index: 0, kind: input, shape index: {}]
  %s1 = inlined_call_operand.hbm [shape: f32[32,128], index: 1, kind: input, shape index: {}]
  %s2 = inlined_call_operand.vmem [shape: f32[1,128], index: 2, kind: input, shape index: {}]
  %s3 = inlined_call_operand.hbm [shape: f32[8,128], index: 3, kind: output, shape index: {}]
  %s4 = sld [smem:[#allocation0]]
  $region30: #{tpu_custom_call.1} parent=0
    _
  %s6 = ssub.s32 1, %s4
  %s7 = scalar_select 0, %s6, %s4
  $region1: #{tpu_custom_call.1} parent=0
    #allocation2 [shape = 'u8[4096]{0}', space=vmem, size = 0x1000, scoped, tag = 'input window, operand 0, single buffered']
    #allocation3 [shape = 's32[1]{0}', space=sflag, size = 0x4, scoped, tag = 'scoped memory for tpu_custom_call.1']
    #allocation4 [shape = 's32[1]{0}', space=sflag, size = 0x4, scoped, tag = 'scoped memory for tpu_custom_call.1']
    #allocation5 [shape = 'u8[16384]{0}', space=vmem, size = 0x4000, scoped, tag = 'input window, operand 1, single buffered']
    #allocation6 [shape = 's32[1]{0}', space=sflag, size = 0x4, scoped, tag = 'scoped memory for tpu_custom_call.1']
    #allocation7 [shape = 'u8[4096]{0}', space=vmem, size = 0x1000, scoped, tag = 'output window, operand 0, single buffered']
    %8 = vsyncpa [#allocation3], 0
    %9 = vsyncpa [#allocation6], 0
    %10 = vsyncpa [#allocation4], 0
    // Predicated region
    $region2: #{tpu_custom_call.1} parent=1 // pred_check
      _
    $region3: #{tpu_custom_call.1} parent=1 // pred_check_branch
      %12 = sbr.rel (0) target = $region5
    $region4: #{tpu_custom_call.1} parent=1 // pred_region
      %14 = vsyncadd [#allocation3], 0
      %s16 = sshll.u32 %s0, 4
      %s17 = int_to_ptr.hbm [resolvable:$true] %s16
      %s18 = sshll.u32 [#allocation2], 4
      %s19 = int_to_ptr.vmem [resolvable:$true] %s18
      %21 = dma.hbm_to_vmem [thread:$0]  %s17, 128, %s19, [#allocation3]
    $region5: #{tpu_custom_call.1} parent=1 // pred_fallthru
      _
    // Predicated region
    $region6: #{tpu_custom_call.1} parent=1 // pred_check
      _
    $region7: #{tpu_custom_call.1} parent=1 // pred_check_branch
      %23 = sbr.rel (0) target = $region9
    $region8: #{tpu_custom_call.1} parent=1 // pred_region
      %25 = vsyncadd [#allocation6], 0
      %s26 = sshll.u32 %s1, 4
      %s27 = int_to_ptr.hbm [resolvable:$true] %s26
      %s28 = sshll.u32 [#allocation5], 4
      %s29 = int_to_ptr.vmem [resolvable:$true] %s28
      %34 = dma.hbm_to_vmem [thread:$0]  %s27, 512, %s29, [#allocation6], 128, 128, 8
    $region9: #{tpu_custom_call.1} parent=1 // pred_fallthru
      _
    // Predicated region
    $region10: #{tpu_custom_call.1} parent=1 // pred_check
      _
    $region11: #{tpu_custom_call.1} parent=1 // pred_check_branch
      %36 = sbr.rel (0) target = $region13
    $region12: #{tpu_custom_call.1} parent=1 // pred_region
      _
    $region13: #{tpu_custom_call.1} parent=1 // pred_fallthru
      _
    // Predicated region
    $region14: #{tpu_custom_call.1} parent=1 // pred_check
      _
    $region15: #{tpu_custom_call.1} parent=1 // pred_check_branch
      %38 = sbr.rel (0) target = $region17
    $region16: #{tpu_custom_call.1} parent=1 // pred_region
      %40 = dma.done [#allocation3], 128
    $region17: #{tpu_custom_call.1} parent=1 // pred_fallthru
      _
    // Predicated region
    $region18: #{tpu_custom_call.1} parent=1 // pred_check
      _
    $region19: #{tpu_custom_call.1} parent=1 // pred_check_branch
      %42 = sbr.rel (0) target = $region21
    $region20: #{tpu_custom_call.1} parent=1 // pred_region
      %44 = dma.done [#allocation6], 512
    $region21: #{tpu_custom_call.1} parent=1 // pred_fallthru
      _
    %v45 = vld [vmem:[#allocation2] sm:$0xff]
    %v46 = vld [vmem:[#allocation5] sm:$0xff]
    %v47 = vld [vmem:[#allocation5 + $0x8] sm:$0xff]
    %v48 = vld [vmem:[#allocation5 + $0x10] sm:$0xff]
    %v49 = vld [vmem:[#allocation5 + $0x18] sm:$0xff]
    %v50 = vld [vmem:[%s2] sm:$0x1]
    %v52 = vperm.slane %v50, 0
    %vm54 = vcmask 261120
    %v56 = vsel %vm54, %v45, 0
    %58 = vmatpush.msra.mxu0 0.0
    %59 = vmatpush.msra.mxu0 0.0
    %60 = vmatpush.msra.mxu0 0.0
    %61 = vmatpush.msra.mxu0 0.0
    %62 = vmatpush.msra.mxu0 0.0
    %63 = vmatpush.msra.mxu0 0.0
    %64 = vmatpush.msra.mxu0 0.0
    %65 = vmatpush.msra.mxu0 0.0
    %66 = vmatpush.msra.mxu0 0.0
    %67 = vmatpush.msra.mxu0 0.0
    %68 = vmatpush.msra.mxu0 0.0
    %69 = vmatpush.msra.mxu0 0.0
    %70 = vmatpush.msra.mxu0 %v49
    %71 = vmatpush.msra.mxu0 %v48
    %72 = vmatpush.msra.mxu0 %v47
    %73 = vmatpush.msra.mxu0 %v46
    %74 = vmatmul.f32.gmra.mxu0 %v56
    %v75 = vpop.f32.mrf.mxu0
    %v76 = vadd.f32 %v52, %v75
    %77 = vdwg.mxu0
    %78 = vst [vmem:[#allocation7] sm:$0xff] %v76
    // Predicated region
    $region22: #{tpu_custom_call.1} parent=1 // pred_check
      _
    $region23: #{tpu_custom_call.1} parent=1 // pred_check_branch
      %80 = sbr.rel (0) target = $region25
    $region24: #{tpu_custom_call.1} parent=1 // pred_region
      %82 = vsyncadd [#allocation4], 0
      %s84 = sshll.u32 [#allocation7], 4
      %s85 = int_to_ptr.vmem [resolvable:$true] %s84
      %s86 = sshll.u32 %s3, 4
      %s87 = int_to_ptr.hbm [resolvable:$true] %s86
      %89 = dma.vmem_to_hbm [thread:$0]  %s85, 128, %s87, [#allocation4]
    $region25: #{tpu_custom_call.1} parent=1 // pred_fallthru
      _
    // Predicated region
    $region26: #{tpu_custom_call.1} parent=1 // pred_check
      _
    $region27: #{tpu_custom_call.1} parent=1 // pred_check_branch
      %91 = sbr.rel (0) target = $region29
    $region28: #{tpu_custom_call.1} parent=1 // pred_region
      %93 = dma.done [#allocation4], 128
    $region29: #{tpu_custom_call.1} parent=1 // pred_fallthru
      _
    %94 = vsyncpa [#allocation3], 1
    %95 = vsyncpa [#allocation6], 1
    %96 = vsyncpa [#allocation4], 1

</llo_original>
